<compile_context>
chip_gen: v7x
topology: tpu7x:2x2x1
jax: 0.10.0
libtpu: 0.0.40
codegen_flags: <defaults>
</compile_context>

<pallas_src>
import functools
import math

import jax
import jax.numpy as jnp
from jax.experimental import pallas as pl
from jax.experimental.pallas import tpu as pltpu


def _tile(dim, pref):
    """Largest tile <= pref that divides dim (falls back to the full dim)."""
    if dim <= pref:
        return dim
    t = pref
    while t >= 8:
        if dim % t == 0:
            return t
        t //= 2
    return dim  # single (full) block


# ---------------------------------------------------------------------------
# 1) Tiled linear projection: out = x @ w (+ bias)
# ---------------------------------------------------------------------------
def _linear_kernel(*refs, has_bias):
    if has_bias:
        x_ref, w_ref, b_ref, o_ref, acc_ref = refs
    else:
        x_ref, w_ref, o_ref, acc_ref = refs
        b_ref = None

    @pl.when(pl.program_id(2) == 0)
    def _():
        acc_ref[...] = jnp.zeros_like(acc_ref)

    # Native-dtype operands straight to the MXU; f32 accumulation.
    acc_ref[...] += jnp.dot(x_ref[...], w_ref[...],
                            preferred_element_type=jnp.float32)

    @pl.when(pl.program_id(2) == pl.num_programs(2) - 1)
    def _():
        r = acc_ref[...]
        if has_bias:
            r = r + b_ref[...].astype(jnp.float32)   # (1, tn) broadcasts over rows
        o_ref[...] = r.astype(o_ref.dtype)


def linear(x, w, bias=None):
    M, K = x.shape
    Kw, N = w.shape
    assert K == Kw, (K, Kw)
    tm = _tile(M, 512)
    tn = _tile(N, 512)
    tk = _tile(K, 512)
    has_bias = bias is not None

    in_specs = [
        pl.BlockSpec((tm, tk), lambda i, j, kk: (i, kk)),
        pl.BlockSpec((tk, tn), lambda i, j, kk: (kk, j)),
    ]
    args = [x, w]
    if has_bias:
        in_specs.append(pl.BlockSpec((1, tn), lambda i, j, kk: (0, j)))
        args.append(bias.reshape(1, N))

    return pl.pallas_call(
        functools.partial(_linear_kernel, has_bias=has_bias),
        out_shape=jax.ShapeDtypeStruct((M, N), x.dtype),
        grid=(M // tm, N // tn, K // tk),
        in_specs=in_specs,
        out_specs=pl.BlockSpec((tm, tn), lambda i, j, kk: (i, j)),
        scratch_shapes=[pltpu.VMEM((tm, tn), jnp.float32)],
        compiler_params=pltpu.CompilerParams(
            dimension_semantics=("parallel", "parallel", "arbitrary")),
    )(*args)


# ---------------------------------------------------------------------------
# 2) Flash attention with fused qk_norm + RoPE + scale, GQA KV reuse.
# ---------------------------------------------------------------------------
def _flash_kernel(*refs, group, scale, softclamp_val, use_norm, use_rope,
                  bias_mode, eps):
    i = 0
    q_ref, k_ref, v_ref = refs[0:3]
    i = 3
    qw_ref = kw_ref = None
    if use_norm:
        qw_ref, kw_ref = refs[i:i + 2]
        i += 2
    cosq_ref = sinq_ref = cosk_ref = sink_ref = perm_ref = None
    if use_rope:
        cosq_ref, sinq_ref, cosk_ref, sink_ref, perm_ref = refs[i:i + 5]
        i += 5
    bias_ref = None
    if bias_mode != "none":
        bias_ref = refs[i]
        i += 1
    o_ref = refs[i]
    i += 1
    qp_ref, m_sc, l_sc, acc_sc = refs[i:i + 4]

    ki = pl.program_id(3)
    grp, tq, dh = q_ref.shape   # (group, tq, Dh)

    def prep(x, w_ref, cos_ref, sin_ref):
        # x: (rows, Dh) in f32. RMSNorm then RoPE; pair-swap via precomputed perm.
        if use_norm:
            var = jnp.mean(x * x, axis=-1, keepdims=True)
            x = x * jax.lax.rsqrt(var + eps) * (1.0 + w_ref[...].astype(jnp.float32))
        if use_rope:
            swapped = jnp.dot(x, perm_ref[...],
                              preferred_element_type=jnp.float32)
            x = x * cos_ref[...] + swapped * sin_ref[...]
        return x

    @pl.when(ki == 0)
    def _():
        m_sc[...] = jnp.full_like(m_sc, -jnp.inf)
        l_sc[...] = jnp.zeros_like(l_sc)
        acc_sc[...] = jnp.zeros_like(acc_sc)
        # Prepare (norm + rope + scale) all `group` query heads ONCE per q tile
        # and stash them (native dtype) for reuse across every KV step.
        for g in range(group):
            xg = q_ref[g].astype(jnp.float32)               # (tq, Dh)
            xg = prep(xg, qw_ref, cosq_ref, sinq_ref) * scale
            qp_ref[pl.ds(g * tq, tq), :] = xg.astype(qp_ref.dtype)

    # Prepare the K tile (norm + rope), back to native dtype for the MXU.
    kf = prep(k_ref[...].astype(jnp.float32), kw_ref, cosk_ref, sink_ref)
    kp = kf.astype(k_ref.dtype)                              # (tk, Dh)
    qp = qp_ref[...]                                         # (group*tq, Dh) pre-scaled

    # q @ k^T via dot_general contracting over Dh: no explicit transpose of k.
    s = jax.lax.dot_general(qp, kp, (((1,), (1,)), ((), ())),
                            preferred_element_type=jnp.float32)  # (group*tq, tk)

    if softclamp_val is not None:
        s = jnp.tanh(s * (1.0 / softclamp_val)) * softclamp_val

    if bias_mode == "shared":                                # (tq, tk) shared by heads
        b = bias_ref[...].astype(jnp.float32)
        s = s + (jnp.tile(b, (group, 1)) if group > 1 else b)
    elif bias_mode == "per_head":                            # (group, tq, tk)
        s = s + bias_ref[...].astype(jnp.float32).reshape(group * tq, -1)

    m_prev = m_sc[...]
    m_new = jnp.maximum(m_prev, s.max(axis=-1, keepdims=True))
    alpha = jnp.exp(m_prev - m_new)
    p = jnp.exp(s - m_new)
    l_sc[...] = alpha * l_sc[...] + p.sum(axis=-1, keepdims=True)
    acc_sc[...] = alpha * acc_sc[...] + jnp.dot(p.astype(v_ref.dtype), v_ref[...],
                                                preferred_element_type=jnp.float32)
    m_sc[...] = m_new

    @pl.when(ki == pl.num_programs(3) - 1)
    def _():
        l = l_sc[...]
        inv = pl.reciprocal(jnp.where(l == 0.0, 1.0, l), approx=True)
        o_ref[...] = (acc_sc[...] * inv).reshape(grp, tq, dh).astype(o_ref.dtype)


def flash_attention(q, k, v, *, scale, bias=None, softclamp_val=None,
                    q_norm_w=None, k_norm_w=None, cos_tab=None, sin_tab=None,
                    rms_eps=1e-6):
    """q: (B, H, T, Dh); k, v: (B, Hkv, Tk, Dh); bias: additive (Bm, {1,H}, T, Tk).

    cos_tab/sin_tab: (Tk, Dh) with duplicated pairs; sin_tab already sign-folded
    (-sin on even lanes, +sin on odd lanes).
    """
    B, H, T, Dh = q.shape
    _, Hkv, Tk, _ = k.shape
    assert H % Hkv == 0
    group = H // Hkv
    tq = _tile(T, 256)
    tk = _tile(Tk, 512)
    use_norm = q_norm_w is not None
    use_rope = cos_tab is not None

    in_specs = [
        # q tile covers all `group` heads sharing one KV head.
        pl.BlockSpec((None, group, tq, Dh), lambda b, hk, qi, ki: (b, hk, qi, 0)),
        pl.BlockSpec((None, None, tk, Dh), lambda b, hk, qi, ki: (b, hk, ki, 0)),
        pl.BlockSpec((None, None, tk, Dh), lambda b, hk, qi, ki: (b, hk, ki, 0)),
    ]
    args = [q, k, v]

    if use_norm:
        in_specs += [pl.BlockSpec((1, Dh), lambda b, hk, qi, ki: (0, 0))] * 2
        args += [q_norm_w.reshape(1, Dh).astype(jnp.float32),
                 k_norm_w.reshape(1, Dh).astype(jnp.float32)]

    if use_rope:
        in_specs += [
            pl.BlockSpec((tq, Dh), lambda b, hk, qi, ki: (qi, 0)),   # cos for q rows
            pl.BlockSpec((tq, Dh), lambda b, hk, qi, ki: (qi, 0)),   # signed sin for q
            pl.BlockSpec((tk, Dh), lambda b, hk, qi, ki: (ki, 0)),   # cos for k rows
            pl.BlockSpec((tk, Dh), lambda b, hk, qi, ki: (ki, 0)),   # signed sin for k
            pl.BlockSpec((Dh, Dh), lambda b, hk, qi, ki: (0, 0)),    # pair-swap perm
        ]
        row = jnp.arange(Dh, dtype=jnp.int32)
        perm = (row[None, :] == (row[:, None] ^ 1)).astype(jnp.float32)
        args += [cos_tab, sin_tab, cos_tab, sin_tab, perm]

    bias_mode = "none"
    if bias is not None:
        Bm, Hm = bias.shape[0], bias.shape[1]
        if Hm == 1:
            bias_mode = "shared"
            in_specs.append(pl.BlockSpec(
                (None, None, tq, tk),
                lambda b, hk, qi, ki: ((b if Bm > 1 else 0), 0, qi, ki)))
        else:
            assert Hm == H, (Hm, H)
            bias_mode = "per_head"
            in_specs.append(pl.BlockSpec(
                (None, group, tq, tk),
                lambda b, hk, qi, ki: ((b if Bm > 1 else 0), hk, qi, ki)))
        args.append(bias)

    kernel = functools.partial(
        _flash_kernel, group=group, scale=scale, softclamp_val=softclamp_val,
        use_norm=use_norm, use_rope=use_rope, bias_mode=bias_mode, eps=rms_eps)

    return pl.pallas_call(
        kernel,
        out_shape=jax.ShapeDtypeStruct((B, H, T, Dh), q.dtype),
        grid=(B, Hkv, T // tq, Tk // tk),
        in_specs=in_specs,
        out_specs=pl.BlockSpec((None, group, tq, Dh),
                               lambda b, hk, qi, ki: (b, hk, qi, 0)),
        scratch_shapes=[
            pltpu.VMEM((group * tq, Dh), q.dtype),        # prepared, pre-scaled q
            pltpu.VMEM((group * tq, 1), jnp.float32),     # running max m
            pltpu.VMEM((group * tq, 1), jnp.float32),     # running denom l
            pltpu.VMEM((group * tq, Dh), jnp.float32),    # f32 accumulator
        ],
        compiler_params=pltpu.CompilerParams(
            dimension_semantics=("parallel", "parallel", "parallel", "arbitrary")),
    )(*args)


# ---------------------------------------------------------------------------
# Full Attention.forward (eval path)
# ---------------------------------------------------------------------------
def attention_forward(hidden_states, params, *, num_heads, num_key_value_heads,
                      head_dim, attention_mask=None, rotary_pe=None,
                      qk_norm=False, softclamp_logits_val=None, rms_eps=1e-6):
    B, T, E = hidden_states.shape
    x2 = hidden_states.reshape(B * T, E)

    q = linear(x2, params["wq"], params.get("bq"))
    k = linear(x2, params["wk"], params.get("bk"))
    v = linear(x2, params["wv"], params.get("bv"))

    def split_heads(t, n):
        return t.reshape(B, T, n, head_dim).transpose(0, 2, 1, 3)

    q = split_heads(q, num_heads)
    k = split_heads(k, num_key_value_heads)
    v = split_heads(v, num_key_value_heads)

    cos_tab = sin_tab = None
    if rotary_pe is not None:
        assert rotary_pe.shape[0] == 1, "only b_rope == 1 supported"
        rp = rotary_pe[0]                                            # (T, Dh//2, 2)
        cos_tab = jnp.repeat(rp[..., 0], 2, axis=-1).astype(jnp.float32)   # (T, Dh)
        sign = jnp.tile(jnp.array([-1.0, 1.0], jnp.float32), head_dim // 2)
        sin_tab = (jnp.repeat(rp[..., 1], 2, axis=-1) * sign).astype(jnp.float32)

    # TODO(synk): past_key_value / use_cache KV-cache concat not implemented.
    attn = flash_attention(
        q, k, v,
        scale=1.0 / math.sqrt(head_dim),
        bias=attention_mask,
        softclamp_val=softclamp_logits_val,
        q_norm_w=params["q_norm_w"] if qk_norm else None,
        k_norm_w=params["k_norm_w"] if qk_norm else None,
        cos_tab=cos_tab, sin_tab=sin_tab, rms_eps=rms_eps)

    attn = attn.transpose(0, 2, 1, 3).reshape(B * T, num_heads * head_dim)
    out = linear(attn, params["wo"], None)
    return out.reshape(B, T, E), None    # (attn_output, present=None)


# ---------------------------------------------------------------------------
# Pure-JAX reference (mirrors the PyTorch non-sdpa eval path)
# ---------------------------------------------------------------------------
def _reference_forward(hidden_states, params, *, num_heads, num_key_value_heads,
                       head_dim, attention_mask=None, rotary_pe=None,
                       qk_norm=False, softclamp_logits_val=None, rms_eps=1e-6):
    B, T, E = hidden_states.shape
    hp = jax.lax.Precision.HIGHEST

    def lin(x, w, b):
        y = jnp.matmul(x, w, precision=hp)
        return y if b is None else y + b

    q = lin(hidden_states, params["wq"], params.get("bq"))
    k = lin(hidden_states, params["wk"], params.get("bk"))
    v = lin(hidden_states, params["wv"], params.get("bv"))

    def split(t, n):
        return t.reshape(B, T, n, head_dim).transpose(0, 2, 1, 3)

    q, k, v = split(q, num_heads), split(k, num_key_value_heads), split(v, num_key_value_heads)

    if qk_norm:
        def rms(x, w):
            xf = x.astype(jnp.float32)
            var = jnp.mean(xf * xf, axis=-1, keepdims=True)
            return (xf * jax.lax.rsqrt(var + rms_eps) * (1.0 + w.astype(jnp.float32))).astype(x.dtype)
        q, k = rms(q, params["q_norm_w"]), rms(k, params["k_norm_w"])

    if rotary_pe is not None:
        def rope(x):
            xs = x.reshape(*x.shape[:-1], -1, 2)
            rp = rotary_pe[:, None]
            o0 = xs[..., 0] * rp[..., 0] - xs[..., 1] * rp[..., 1]
            o1 = xs[..., 1] * rp[..., 0] + xs[..., 0] * rp[..., 1]
            return jnp.stack([o0, o1], axis=-1).reshape(x.shape).astype(x.dtype)
        k, q = rope(k), rope(q)

    g = num_heads // num_key_value_heads
    k = jnp.repeat(k, g, axis=1)
    v = jnp.repeat(v, g, axis=1)

    s = jnp.einsum("bhqd,bhkd->bhqk", q, k, precision=hp) / math.sqrt(head_dim)
    if softclamp_logits_val:
        s = jnp.tanh(s / softclamp_logits_val) * softclamp_logits_val
    if attention_mask is not None:
        s = s + attention_mask
    p = jax.nn.softmax(s.astype(jnp.float32), axis=-1).astype(q.dtype)
    o = jnp.einsum("bhqk,bhkd->bhqd", p, v, precision=hp)
    o = o.transpose(0, 2, 1, 3).reshape(B, T, num_heads * head_dim)
    return jnp.matmul(o, params["wo"], precision=hp)


if __name__ == "__main__":
    B, T = 2, 8
    hidden = 32
    num_heads = 4
    num_kv_heads = 2
    head_dim = 8            # num_heads * head_dim == hidden_size
    qk_norm = True

    key = jax.random.PRNGKey(0)
    ks = jax.random.split(key, 10)
    x = jax.random.normal(ks[0], (B, T, hidden), jnp.float32)
    params = {
        "wq": jax.random.normal(ks[1], (hidden, num_heads * head_dim), jnp.float32) * 0.08,
        "wk": jax.random.normal(ks[2], (hidden, num_kv_heads * head_dim), jnp.float32) * 0.08,
        "wv": jax.random.normal(ks[3], (hidden, num_kv_heads * head_dim), jnp.float32) * 0.08,
        "wo": jax.random.normal(ks[4], (num_heads * head_dim, hidden), jnp.float32) * 0.08,
        "bq": jax.random.normal(ks[5], (num_heads * head_dim,), jnp.float32) * 0.02,
        "bk": jax.random.normal(ks[6], (num_kv_heads * head_dim,), jnp.float32) * 0.02,
        "bv": jax.random.normal(ks[7], (num_kv_heads * head_dim,), jnp.float32) * 0.02,
        "q_norm_w": jax.random.normal(ks[8], (head_dim,), jnp.float32) * 0.1,
        "k_norm_w": jax.random.normal(ks[9], (head_dim,), jnp.float32) * 0.1,
    }

    # Rotary table (cos, sin) pairs: (1, T, head_dim//2, 2)
    inv_freq = 1.0 / (10000.0 ** (jnp.arange(0, head_dim, 2, dtype=jnp.float32) / head_dim))
    theta = jnp.arange(T, dtype=jnp.float32)[:, None] * inv_freq[None, :]
    rotary_pe = jnp.stack([jnp.cos(theta), jnp.sin(theta)], axis=-1)[None]

    # Additive causal attention bias (1, 1, T, T)
    causal = jnp.tril(jnp.ones((T, T), jnp.bool_))
    attention_mask = jnp.where(causal, 0.0, -1e9).astype(jnp.float32)[None, None]

    cfg = dict(num_heads=num_heads, num_key_value_heads=num_kv_heads, head_dim=head_dim,
               attention_mask=attention_mask, rotary_pe=rotary_pe,
               qk_norm=qk_norm, softclamp_logits_val=None)

    out, present = attention_forward(x, params, **cfg)
    jax.block_until_ready(out)

    ref = _reference_forward(x, params, **cfg)
    assert out.shape == (B, T, hidden), out.shape
    assert jnp.allclose(out, ref, atol=2e-3, rtol=2e-3), \
        f"mismatch: max abs err = {jnp.max(jnp.abs(out - ref))}"

    print("KERNEL_OK")
</pallas_src>

<mosaic_0001>
module attributes {stable_mosaic.version = 11 : i64} {
  func.func @_linear_kernel(%arg0: i32, %arg1: i32, %arg2: i32, %arg3: memref<16x32xf32, #tpu.memory_space<vmem>>, %arg4: memref<32x32xf32, #tpu.memory_space<vmem>>, %arg5: memref<1x32xf32, #tpu.memory_space<vmem>>, %arg6: memref<16x32xf32, #tpu.memory_space<vmem>>, %arg7: memref<16x32xf32, #tpu.memory_space<vmem>>) attributes {dimension_semantics = [#tpu.dimension_semantics<parallel>, #tpu.dimension_semantics<parallel>, #tpu.dimension_semantics<arbitrary>], iteration_bounds = array<i64: 1, 1, 1>, scalar_prefetch = 0 : i64, scratch_operands = 1 : i64, tpu.core_type = #tpu.core_type<tc>, window_params = [{transform_indices = @transform_0, window_bounds = array<i64: 16, 32>}, {transform_indices = @transform_1, window_bounds = array<i64: 32, 32>}, {transform_indices = @transform_2, window_bounds = array<i64: 1, 32>}, {transform_indices = @transform_3, window_bounds = array<i64: 16, 32>}]} {
    %c0_i32 = arith.constant 0 : i32
    %0 = arith.cmpi eq, %arg2, %c0_i32 : i32
    %1 = arith.extui %0 : i1 to i32
    %c0_i32_0 = arith.constant 0 : i32
    %2 = arith.cmpi ne, %1, %c0_i32_0 : i32
    scf.if %2 {
      %cst_10 = arith.constant 0.000000e+00 : f32
      %12 = vector.broadcast %cst_10 : f32 to vector<16x32xf32>
      %c0_11 = arith.constant 0 : index
      %c0_12 = arith.constant 0 : index
      %13 = vector.load %arg7[%c0_11, %c0_12] : memref<16x32xf32, #tpu.memory_space<vmem>>, vector<16x32xf32>
      tpu.vector_store %arg7[%c0_11, %c0_12], %12 {strides = array<i32>} : memref<16x32xf32, #tpu.memory_space<vmem>>, vector<16x32xf32>,
    } else {
    }
    %c0 = arith.constant 0 : index
    %c0_1 = arith.constant 0 : index
    %3 = vector.load %arg7[%c0, %c0_1] : memref<16x32xf32, #tpu.memory_space<vmem>>, vector<16x32xf32>
    %c0_2 = arith.constant 0 : index
    %c0_3 = arith.constant 0 : index
    %4 = vector.load %arg3[%c0_2, %c0_3] : memref<16x32xf32, #tpu.memory_space<vmem>>, vector<16x32xf32>
    %c0_4 = arith.constant 0 : index
    %c0_5 = arith.constant 0 : index
    %5 = vector.load %arg4[%c0_4, %c0_5] : memref<32x32xf32, #tpu.memory_space<vmem>>, vector<32x32xf32>
    %cst = arith.constant dense<0.000000e+00> : vector<16x32xf32>
    %6 = tpu.matmul %4, %5, %cst {dimension_numbers = #tpu.dot_dimension_numbers<[1], [0], [0], [1], [0, 0, 1, 1], [], []>} : vector<16x32xf32>, vector<32x32xf32>, vector<16x32xf32> -> vector<16x32xf32>
    %7 = arith.addf %3, %6 : vector<16x32xf32>
    %c0_6 = arith.constant 0 : index
    %c0_7 = arith.constant 0 : index
    %8 = vector.load %arg7[%c0_6, %c0_7] : memref<16x32xf32, #tpu.memory_space<vmem>>, vector<16x32xf32>
    tpu.vector_store %arg7[%c0_6, %c0_7], %7 {strides = array<i32>} : memref<16x32xf32, #tpu.memory_space<vmem>>, vector<16x32xf32>,
    %c0_i32_8 = arith.constant 0 : i32
    %9 = arith.cmpi eq, %arg2, %c0_i32_8 : i32
    %10 = arith.extui %9 : i1 to i32
    %c0_i32_9 = arith.constant 0 : i32
    %11 = arith.cmpi ne, %10, %c0_i32_9 : i32
    scf.if %11 {
      %c0_10 = arith.constant 0 : index
      %c0_11 = arith.constant 0 : index
      %12 = vector.load %arg7[%c0_10, %c0_11] : memref<16x32xf32, #tpu.memory_space<vmem>>, vector<16x32xf32>
      %c0_12 = arith.constant 0 : index
      %c0_13 = arith.constant 0 : index
      %13 = vector.load %arg5[%c0_12, %c0_13] : memref<1x32xf32, #tpu.memory_space<vmem>>, vector<1x32xf32>
      %14 = vector.broadcast %13 : vector<1x32xf32> to vector<16x32xf32>
      %15 = arith.addf %12, %14 : vector<16x32xf32>
      %c0_14 = arith.constant 0 : index
      %c0_15 = arith.constant 0 : index
      %16 = vector.load %arg6[%c0_14, %c0_15] : memref<16x32xf32, #tpu.memory_space<vmem>>, vector<16x32xf32>
      tpu.vector_store %arg6[%c0_14, %c0_15], %15 {strides = array<i32>} : memref<16x32xf32, #tpu.memory_space<vmem>>, vector<16x32xf32>,
    } else {
    }
    return
  }
  func.func @transform_0(%arg0: i32, %arg1: i32, %arg2: i32) -> (i32, i32) {
    %c0_i32 = arith.constant 0 : i32
    return %arg0, %arg2 : i32, i32
  }
  func.func @transform_1(%arg0: i32, %arg1: i32, %arg2: i32) -> (i32, i32) {
    %c0_i32 = arith.constant 0 : i32
    return %arg2, %arg1 : i32, i32
  }
  func.func @transform_2(%arg0: i32, %arg1: i32, %arg2: i32) -> (i32, i32) {
    %c0_i32 = arith.constant 0 : i32
    %c0_i32_0 = arith.constant 0 : i32
    return %c0_i32, %arg1 : i32, i32
  }
  func.func @transform_3(%arg0: i32, %arg1: i32, %arg2: i32) -> (i32, i32) {
    %c0_i32 = arith.constant 0 : i32
    return %arg0, %arg1 : i32, i32
  }
}

</mosaic_0001>

<llo_original>
// kernel: tpu_custom_call.1
$region0: #{tpu_custom_call.1}
  #allocation0 [shape = 'u32[]', space=smem, size = 0x4, offset = 0x4, fixed_abs, tag = 'smem constant byte address 0x4 - core index']
  #allocation1 [shape = 'u32[144,128]{1,0:T(1,128)}', space=vmem, size = 0x12000, scoped, tag = 'internal scratch']
  #allocation2 [shape = 'f32[16,32]{1,0:T(8,128)}', space=vmem, size = 0x2000, scoped, tag = 'scratch operand']
  %s0 = inlined_call_operand.hbm [shape: f32[16,32], index: 0, kind: input, shape index: {}]
  %s1 = inlined_call_operand.hbm [shape: f32[32,32], index: 1, kind: input, shape index: {}]
  %s2 = inlined_call_operand.vmem [shape: f32[1,32], index: 2, kind: input, shape index: {}]
  %s3 = inlined_call_operand.hbm [shape: f32[16,32], index: 3, kind: output, shape index: {}]
  %s4 = sld [smem:[#allocation0]]
  $region38: #{tpu_custom_call.1} parent=0
    _
  %s6 = ssub.s32 1, %s4
  %s7 = scalar_select 0, %s6, %s4
  $region1: #{tpu_custom_call.1} parent=0
    #allocation3 [shape = 'u8[8192]{0}', space=vmem, size = 0x2000, scoped, tag = 'input window, operand 0, single buffered']
    #allocation4 [shape = 's32[1]{0}', space=sflag, size = 0x4, scoped, tag = 'scoped memory for tpu_custom_call.1']
    #allocation5 [shape = 's32[1]{0}', space=sflag, size = 0x4, scoped, tag = 'scoped memory for tpu_custom_call.1']
    #allocation6 [shape = 'u8[16384]{0}', space=vmem, size = 0x4000, scoped, tag = 'input window, operand 1, single buffered']
    #allocation7 [shape = 's32[1]{0}', space=sflag, size = 0x4, scoped, tag = 'scoped memory for tpu_custom_call.1']
    #allocation8 [shape = 'u8[8192]{0}', space=vmem, size = 0x2000, scoped, tag = 'output window, operand 0, single buffered']
    %8 = vsyncpa [#allocation4], 0
    %9 = vsyncpa [#allocation7], 0
    %10 = vsyncpa [#allocation5], 0
    // Predicated region
    $region2: #{tpu_custom_call.1} parent=1 // pred_check
      _
    $region3: #{tpu_custom_call.1} parent=1 // pred_check_branch
      %12 = sbr.rel (0) target = $region5
    $region4: #{tpu_custom_call.1} parent=1 // pred_region
      %s14 = ssub.s32 256, 256
      %15 = vsyncadd [#allocation4], %s14
      %s16 = sshll.u32 [#allocation3], 4
      %s17 = int_to_ptr.vmem [resolvable:$true] %s16
      %22 = dma.hbm_to_vmem [thread:$0]  %s0, 256, %s17, [#allocation4], 128, 128, 8
    $region5: #{tpu_custom_call.1} parent=1 // pred_fallthru
      _
    // Predicated region
    $region6: #{tpu_custom_call.1} parent=1 // pred_check
      _
    $region7: #{tpu_custom_call.1} parent=1 // pred_check_branch
      %24 = sbr.rel (0) target = $region9
    $region8: #{tpu_custom_call.1} parent=1 // pred_region
      %s26 = ssub.s32 512, 512
      %27 = vsyncadd [#allocation7], %s26
      %s28 = sshll.u32 [#allocation6], 4
      %s29 = int_to_ptr.vmem [resolvable:$true] %s28
      %34 = dma.hbm_to_vmem [thread:$0]  %s1, 512, %s29, [#allocation7], 128, 128, 8
    $region9: #{tpu_custom_call.1} parent=1 // pred_fallthru
      _
    // Predicated region
    $region10: #{tpu_custom_call.1} parent=1 // pred_check
      _
    $region11: #{tpu_custom_call.1} parent=1 // pred_check_branch
      %36 = sbr.rel (0) target = $region13
    $region12: #{tpu_custom_call.1} parent=1 // pred_region
      _
    $region13: #{tpu_custom_call.1} parent=1 // pred_fallthru
      _
    // Predicated region
    $region14: #{tpu_custom_call.1} parent=1 // pred_check
      _
    $region15: #{tpu_custom_call.1} parent=1 // pred_check_branch
      %38 = sbr.rel (0) target = $region17
    $region16: #{tpu_custom_call.1} parent=1 // pred_region
      %39 = dma.done [#allocation4], 256
    $region17: #{tpu_custom_call.1} parent=1 // pred_fallthru
      _
    // Predicated region
    $region18: #{tpu_custom_call.1} parent=1 // pred_check
      _
    $region19: #{tpu_custom_call.1} parent=1 // pred_check_branch
      %41 = sbr.rel (0) target = $region21
    $region20: #{tpu_custom_call.1} parent=1 // pred_region
      %42 = dma.done [#allocation7], 512
    $region21: #{tpu_custom_call.1} parent=1 // pred_fallthru
      _
    %p43 = scmp.eq.s32.totalorder 0, 0
    // Predicated region
    $region22: #{tpu_custom_call.1} parent=1 // pred_check
      %p44 = pneg %p43
    $region23: #{tpu_custom_call.1} parent=1 // pred_check_branch
      %46 = sbr.rel (%p44) target = $region25
    $region24: #{tpu_custom_call.1} parent=1 // pred_region
      %vm47 = vcmask 261120
      %48 = vst.msk [vmem:[#allocation2] sm:$0xff] %vm47, 0.0
      %49 = vst.msk [vmem:[#allocation2 + $0x8] sm:$0xff] %vm47, 0.0
    $region25: #{tpu_custom_call.1} parent=1 // pred_fallthru
      _
    %v50 = vld [vmem:[#allocation2] sm:$0xff]
    %v51 = vld [vmem:[#allocation2 + $0x8] sm:$0xff]
    %v52 = vld [vmem:[#allocation3] sm:$0xff]
    %v53 = vld [vmem:[#allocation3 + $0x8] sm:$0xff]
    %v54 = vld [vmem:[#allocation6] sm:$0xff]
    %v55 = vld [vmem:[#allocation6 + $0x8] sm:$0xff]
    %v56 = vld [vmem:[#allocation6 + $0x10] sm:$0xff]
    %v57 = vld [vmem:[#allocation6 + $0x18] sm:$0xff]
    %vm58 = vcmask 261120
    %v60 = vsel %vm58, %v52, 0
    %v63 = vsel %vm58, %v53, 0
    %65 = vmatprep.subr.mxu0 0.0
    %66 = vmatpush1.msra.mxu0 %v54
    %67 = vmatprep.subr.mxu0 0.0
    %68 = vmatpush1.msra.mxu0 %v55
    %69 = vmatprep.subr.mxu0 0.0
    %70 = vmatpush1.msra.mxu0 %v56
    %71 = vmatprep.subr.mxu0 0.0
    %72 = vmatpush1.msra.mxu0 %v57
    %73 = vmatprep.subr.mxu0 0.0
    %74 = vmatpush1.msra.mxu0 0.0
    %75 = vmatprep.subr.mxu0 0.0
    %76 = vmatpush1.msra.mxu0 0.0
    %77 = vmatprep.subr.mxu0 0.0
    %78 = vmatpush1.msra.mxu0 0.0
    %79 = vmatprep.subr.mxu0 0.0
    %80 = vmatpush1.msra.mxu0 0.0
    %81 = vmatprep.subr.mxu0 0.0
    %82 = vmatpush1.msra.mxu0 0.0
    %83 = vmatprep.subr.mxu0 0.0
    %84 = vmatpush1.msra.mxu0 0.0
    %85 = vmatprep.subr.mxu0 0.0
    %86 = vmatpush1.msra.mxu0 0.0
    %87 = vmatprep.subr.mxu0 0.0
    %88 = vmatpush1.msra.mxu0 0.0
    %89 = vmatprep.subr.mxu0 0.0
    %90 = vmatpush1.msra.mxu0 0.0
    %91 = vmatprep.subr.mxu0 0.0
    %92 = vmatpush1.msra.mxu0 0.0
    %93 = vmatprep.subr.mxu0 0.0
    %94 = vmatpush1.msra.mxu0 0.0
    %95 = vmatprep.subr.mxu0 0.0
    %96 = vmatpush1.msra.mxu0 0.0
    %97 = vmatprep.subr.mxu0 0.0
    %98 = vmatpush1.msra.mxu0 0.0
    %99 = vmatprep.subr.mxu0 0.0
    %100 = vmatpush1.msra.mxu0 0.0
    %101 = vmatprep.subr.mxu0 0.0
    %102 = vmatpush1.msra.mxu0 0.0
    %103 = vmatprep.subr.mxu0 0.0
    %104 = vmatpush1.msra.mxu0 0.0
    %105 = vmatprep.subr.mxu0 0.0
    %106 = vmatpush1.msra.mxu0 0.0
    %107 = vmatprep.subr.mxu0 0.0
    %108 = vmatpush1.msra.mxu0 0.0
    %109 = vmatprep.subr.mxu0 0.0
    %110 = vmatpush1.msra.mxu0 0.0
    %111 = vmatprep.subr.mxu0 0.0
    %112 = vmatpush1.msra.mxu0 0.0
    %113 = vmatprep.subr.mxu0 0.0
    %114 = vmatpush1.msra.mxu0 0.0
    %115 = vmatprep.subr.mxu0 0.0
    %116 = vmatpush1.msra.mxu0 0.0
    %117 = vmatprep.subr.mxu0 0.0
    %118 = vmatpush1.msra.mxu0 0.0
    %119 = vmatprep.subr.mxu0 0.0
    %120 = vmatpush1.msra.mxu0 0.0
    %121 = vmatprep.subr.mxu0 0.0
    %122 = vmatpush1.msra.mxu0 0.0
    %123 = vmatprep.subr.mxu0 0.0
    %124 = vmatpush1.msra.mxu0 0.0
    %125 = vmatprep.subr.mxu0 0.0
    %126 = vmatpush1.msra.mxu0 0.0
    %127 = vmatprep.subr.mxu0 0.0
    %128 = vmatpush1.msra.mxu0 0.0
    %129 = vmatprep.mubr.f32.mxu0 0.0
    %130 = vmatmul.mubr.f32.gmra.mrb[0].mxu0 %v60
    %v131 = vpop.f32.mrb[0].mxu0
    %v132 = vadd.f32 0.0, %v131
    %v133 = vpop.f32.mrb[0].mxu0
    %134 = vmatprep.mubr.f32.mxu0 0.0
    %135 = vmatmul.mubr.f32.gmra.mrb[0].mxu0 %v63
    %v136 = vpop.f32.mrb[0].mxu0
    %v137 = vadd.f32 0.0, %v136
    %v138 = vpop.f32.mrb[0].mxu0
    %139 = vdwg.mxu0
    %v140 = vadd.f32 %v50, %v132
    %v141 = vadd.f32 %v51, %v137
    %142 = vst.msk [vmem:[#allocation2] sm:$0xff] %vm58, %v140
    %143 = vst.msk [vmem:[#allocation2 + $0x8] sm:$0xff] %vm58, %v141
    // Predicated region
    $region26: #{tpu_custom_call.1} parent=1 // pred_check
      %p144 = pneg %p43
    $region27: #{tpu_custom_call.1} parent=1 // pred_check_branch
      %146 = sbr.rel (%p144) target = $region29
    $region28: #{tpu_custom_call.1} parent=1 // pred_region
      %v147 = vld [vmem:[#allocation2] sm:$0xff]
      %v148 = vld [vmem:[#allocation2 + $0x8] sm:$0xff]
      %v149 = vld [vmem:[%s2] sm:$0x1]
      %v151 = vlaneseq
      %v152 = vshrl.u32 %v151, 7
      %v153 = vsub.s32 0, %v152
      %v154 = vrot.slane %v149, %v153
      %v156 = vadd.f32 %v147, %v154
      %v157 = vadd.f32 %v148, %v154
      %158 = vst.msk [vmem:[#allocation8] sm:$0xff] %vm58, %v156
      %159 = vst.msk [vmem:[#allocation8 + $0x8] sm:$0xff] %vm58, %v157
    $region29: #{tpu_custom_call.1} parent=1 // pred_fallthru
      _
    // Predicated region
    $region30: #{tpu_custom_call.1} parent=1 // pred_check
      _
    $region31: #{tpu_custom_call.1} parent=1 // pred_check_branch
      %161 = sbr.rel (0) target = $region33
    $region32: #{tpu_custom_call.1} parent=1 // pred_region
      %s163 = ssub.s32 256, 256
      %164 = vsyncadd [#allocation5], %s163
      %s165 = sshll.u32 [#allocation8], 4
      %s166 = int_to_ptr.vmem [resolvable:$true] %s165
      %171 = dma.vmem_to_hbm [thread:$0]  %s166, 256, %s3, [#allocation5], 128, 128, 8
    $region33: #{tpu_custom_call.1} parent=1 // pred_fallthru
      _
    // Predicated region
    $region34: #{tpu_custom_call.1} parent=1 // pred_check
      _
    $region35: #{tpu_custom_call.1} parent=1 // pred_check_branch
      %173 = sbr.rel (0) target = $region37
    $region36: #{tpu_custom_call.1} parent=1 // pred_region
      %174 = dma.done [#allocation5], 256
    $region37: #{tpu_custom_call.1} parent=1 // pred_fallthru
      _
    %175 = vsyncpa [#allocation4], 1
    %176 = vsyncpa [#allocation7], 1
    %177 = vsyncpa [#allocation5], 1

</llo_original>
